<compile_context>
chip_gen: v6e
topology: v6e:2x2x1
jax: 0.10.0
libtpu: 0.0.40
codegen_flags: <defaults>
</compile_context>

<pallas_src>
import jax
import jax.numpy as jnp
import numpy as np
from jax.experimental import pallas as pl
from jax.experimental.pallas import tpu as pltpu

# ---- module constants (synthetic, small) -----------------------------------
POP_SIZE = 8
BINS = 4
NUM_F_MEAN = 1
NUM_CR_MEAN = 1
NUM_W_MEAN = POP_SIZE          # mu_w head outputs POP_SIZE means

CELLSIZE_F = 32
CELLSIZE_CR = 32
CELLSIZE_W = 32
HIDDENS = (CELLSIZE_F, CELLSIZE_CR, CELLSIZE_W)
MU_DIMS = (NUM_F_MEAN, NUM_CR_MEAN, NUM_W_MEAN)

IN_F = POP_SIZE + 4            # 12
IN_CR = POP_SIZE + 4           # 12
IN_W = POP_SIZE + BINS * 2     # 16
IN_DIMS = (IN_F, IN_CR, IN_W)

NNETS = 3
HT = sum(HIDDENS)              # 96  = total real hidden across nets
HT_PAD = 128                   # 128-lane padded hidden block width

IN_PAD = 32                    # per-net padded x width: [x | 1 | 0-pad]
XH_PAD = IN_PAD + max(HIDDENS)  # 64 per-net [x|1|0|h] width (all H equal)
XH_TOTAL = NNETS * XH_PAD      # 192 = contraction dim for the gate matmul
GATES_TOTAL = 4 * HT_PAD       # 512 = gate-major, 128-aligned gate blocks
HEAD_REAL = sum(MU_DIMS) + NNETS   # 13 real head columns (mu's + sigmas)
HEAD_PAD = 128                 # padded head width (full lane group)
OUT_TOTAL = 2 * HT_PAD + HEAD_PAD  # 384 packed output width [h|c|heads]

BATCH = 2


# ---- Pallas kernel: whole agent step in one invocation ----------------------
def _pg_agent_kernel(xh_ref, c_ref, wg_ref, wh_ref, bh_ref, out_ref):
    # gates for ALL nets: (B, 512) = one block-diagonal MXU matmul (bf16 in,
    # f32 accumulate).  Gate bias is folded into wg via the per-net ones column.
    gates = jnp.dot(xh_ref[...], wg_ref[...],
                    preferred_element_type=jnp.float32)

    # gate-major, 128-aligned layout: [i(128) | f(128) | g(128) | o(128)]
    i_all = jax.nn.sigmoid(gates[:, 0 * HT_PAD:1 * HT_PAD])
    f_all = jax.nn.sigmoid(gates[:, 1 * HT_PAD:2 * HT_PAD])
    g_all = jnp.tanh(gates[:, 2 * HT_PAD:3 * HT_PAD])
    o_all = jax.nn.sigmoid(gates[:, 3 * HT_PAD:4 * HT_PAD])

    c_next = f_all * c_ref[...] + i_all * g_all       # (B, 128)
    h_next = o_all * jnp.tanh(c_next)                 # (B, 128), pad cols == 0

    # all mu/sigma heads of all nets: one block-diagonal matmul + one sigmoid
    heads = jax.nn.sigmoid(
        jnp.dot(h_next.astype(jnp.bfloat16), wh_ref[...],
                preferred_element_type=jnp.float32) + bh_ref[...])

    # single lane-dense packed store (B, 384); every section is 128-aligned
    out_ref[...] = jnp.concatenate([h_next, c_next, heads], axis=1)


def _vmem_spec():
    return pl.BlockSpec(memory_space=pltpu.MemorySpace.VMEM)


# ---- parameter construction (torch layout) + one-time packing ---------------
def make_net_params(key, in_dim, hidden, mu_dim):
    """Per-net parameters in native PyTorch layout."""
    ks = jax.random.split(key, 8)
    bound = 1.0 / np.sqrt(hidden)
    u = lambda k, shape: jax.random.uniform(k, shape, jnp.float32, -bound, bound)
    return dict(
        w_ih=u(ks[0], (4 * hidden, in_dim)),   # torch LSTMCell (4H, In)
        w_hh=u(ks[1], (4 * hidden, hidden)),   # torch LSTMCell (4H, H)
        b_ih=u(ks[2], (4 * hidden,)),
        b_hh=u(ks[3], (4 * hidden,)),
        w_mu=u(ks[4], (mu_dim, hidden)),       # torch Linear (out, in)
        b_mu=u(ks[5], (mu_dim,)),
        w_sig=u(ks[6], (1, hidden)),
        b_sig=u(ks[7], (1,)),
    )


def pack_agent_params(nets):
    """Pack per-net torch-layout params into block-diagonal, gate-major slabs.

    Done ONCE (numpy, host side) — not per forward call.
      wg : (192, 512) bf16, gate g of net n at [n*64 .. , g*128 + n*32 ..]
           (gate bias folded into the row matching the net's ones column)
      wh : (128, 128) bf16, head columns [mu_f, sig_f, mu_cr, sig_cr, mu_w, sig_w]
      bh : (1, 128)   f32 head bias
    """
    wg = np.zeros((XH_TOTAL, GATES_TOTAL), np.float32)
    wh = np.zeros((HT_PAD, HEAD_PAD), np.float32)
    bh = np.zeros((1, HEAD_PAD), np.float32)

    h_off = 0       # cumulative hidden offset across nets
    head_col = 0    # cumulative head column offset
    for n, p in enumerate(nets):
        hidden = p["w_hh"].shape[1]
        in_dim = p["w_ih"].shape[1]
        w_ih_t = np.asarray(p["w_ih"]).T                 # (In, 4H)
        w_hh_t = np.asarray(p["w_hh"]).T                 # (H, 4H)
        b = np.asarray(p["b_ih"]) + np.asarray(p["b_hh"])  # (4H,)

        row0 = n * XH_PAD
        for g in range(4):                               # torch order i,f,g,o
            col0 = g * HT_PAD + h_off                    # 128-aligned gate blk
            wg[row0:row0 + in_dim, col0:col0 + hidden] = \
                w_ih_t[:, g * hidden:(g + 1) * hidden]
            # folded gate bias: contracted against the ones column at x[in_dim]
            wg[row0 + in_dim, col0:col0 + hidden] = b[g * hidden:(g + 1) * hidden]
            wg[row0 + IN_PAD:row0 + IN_PAD + hidden, col0:col0 + hidden] = \
                w_hh_t[:, g * hidden:(g + 1) * hidden]

        # heads: mu then sigma for this net
        m = p["w_mu"].shape[0]
        wh[h_off:h_off + hidden, head_col:head_col + m] = np.asarray(p["w_mu"]).T
        bh[0, head_col:head_col + m] = np.asarray(p["b_mu"])
        head_col += m
        wh[h_off:h_off + hidden, head_col] = np.asarray(p["w_sig"])[0]
        bh[0, head_col] = np.asarray(p["b_sig"])[0]
        head_col += 1

        h_off += hidden

    return dict(wg=jnp.asarray(wg, jnp.bfloat16),
                wh=jnp.asarray(wh, jnp.bfloat16),
                bh=jnp.asarray(bh, jnp.float32))


# ---- fused forward -----------------------------------------------------------
@jax.jit
def pg_agent_forward(packed, x_f, h_f, c_f, x_cr, h_cr, c_cr, x_w, h_w, c_w):
    del c_f  # NB: original module passes (h_f, h_f) to lstm_f — c_f is unused.
    B = x_f.shape[0]

    def pack_xh(x, h):
        # per-net block: [x(in_dim) | 1 (bias ride-along) | 0-pad | h(32)]
        ones = jnp.ones((B, 1), jnp.float32)
        pad = jnp.zeros((B, IN_PAD - 1 - x.shape[1]), jnp.float32)
        return jnp.concatenate([x, ones, pad, h], axis=1)

    # (B, 192) bf16 activation slab
    xh = jnp.concatenate(
        [pack_xh(x_f, h_f), pack_xh(x_cr, h_cr), pack_xh(x_w, h_w)],
        axis=1).astype(jnp.bfloat16)
    # stacked cell states, zero-padded to 128 lanes; f-net uses h_f as its cell
    # state (original module bug, preserved).
    c_all = jnp.concatenate(
        [h_f, c_cr, c_w, jnp.zeros((B, HT_PAD - HT), jnp.float32)], axis=1)

    out = pl.pallas_call(
        _pg_agent_kernel,
        out_shape=jax.ShapeDtypeStruct((B, OUT_TOTAL), jnp.float32),
        in_specs=[_vmem_spec()] * 5,
        out_specs=_vmem_spec(),
    )(xh, c_all, packed["wg"], packed["wh"], packed["bh"])

    # unpack the lane-dense slab in the JAX wrapper (cheap XLA slices)
    h_next = out[:, 0:HT]                       # real hidden: first 96 lanes
    c_next = out[:, HT_PAD:HT_PAD + HT]
    heads = out[:, 2 * HT_PAD:2 * HT_PAD + HEAD_REAL]

    h_next_f = h_next[:, 0:CELLSIZE_F]
    h_next_cr = h_next[:, CELLSIZE_F:CELLSIZE_F + CELLSIZE_CR]
    h_next_w = h_next[:, CELLSIZE_F + CELLSIZE_CR:HT]
    c_next_f = c_next[:, 0:CELLSIZE_F]
    c_next_cr = c_next[:, CELLSIZE_F:CELLSIZE_F + CELLSIZE_CR]
    c_next_w = c_next[:, CELLSIZE_F + CELLSIZE_CR:HT]

    col = 0
    mu_f = heads[:, col:col + NUM_F_MEAN]; col += NUM_F_MEAN
    sigma_f = heads[:, col:col + 1]; col += 1
    mu_cr = heads[:, col:col + NUM_CR_MEAN]; col += NUM_CR_MEAN
    sigma_cr = heads[:, col:col + 1]; col += 1
    mu_w = heads[:, col:col + NUM_W_MEAN]; col += NUM_W_MEAN
    sigma_w = heads[:, col:col + 1]; col += 1

    return (mu_f, sigma_f, h_next_f, c_next_f,
            mu_cr, sigma_cr, h_next_cr, c_next_cr,
            mu_w, sigma_w, h_next_w, c_next_w)


# ---- pure-JAX reference (torch-layout f32 weights) for verification ----------
def _ref_net(x, h, c, p):
    hidden = p["w_hh"].shape[1]
    gates = x @ p["w_ih"].T + h @ p["w_hh"].T + p["b_ih"] + p["b_hh"]
    i_g = jax.nn.sigmoid(gates[:, 0 * hidden:1 * hidden])
    f_g = jax.nn.sigmoid(gates[:, 1 * hidden:2 * hidden])
    g_g = jnp.tanh(gates[:, 2 * hidden:3 * hidden])
    o_g = jax.nn.sigmoid(gates[:, 3 * hidden:4 * hidden])
    c_next = f_g * c + i_g * g_g
    h_next = o_g * jnp.tanh(c_next)
    mu = jax.nn.sigmoid(h_next @ p["w_mu"].T + p["b_mu"])
    sigma = jax.nn.sigmoid(h_next @ p["w_sig"].T + p["b_sig"])
    return mu, sigma, h_next, c_next


if __name__ == "__main__":
    key = jax.random.PRNGKey(0)
    k_pf, k_pcr, k_pw, k_in = jax.random.split(key, 4)

    net_f = make_net_params(k_pf, IN_F, CELLSIZE_F, NUM_F_MEAN)
    net_cr = make_net_params(k_pcr, IN_CR, CELLSIZE_CR, NUM_CR_MEAN)
    net_w = make_net_params(k_pw, IN_W, CELLSIZE_W, NUM_W_MEAN)
    packed = pack_agent_params([net_f, net_cr, net_w])

    ki = jax.random.split(k_in, 9)
    x_f = jax.random.normal(ki[0], (BATCH, IN_F), jnp.float32)
    h_f = jax.random.normal(ki[1], (BATCH, CELLSIZE_F), jnp.float32)
    c_f = jax.random.normal(ki[2], (BATCH, CELLSIZE_F), jnp.float32)
    x_cr = jax.random.normal(ki[3], (BATCH, IN_CR), jnp.float32)
    h_cr = jax.random.normal(ki[4], (BATCH, CELLSIZE_CR), jnp.float32)
    c_cr = jax.random.normal(ki[5], (BATCH, CELLSIZE_CR), jnp.float32)
    x_w = jax.random.normal(ki[6], (BATCH, IN_W), jnp.float32)
    h_w = jax.random.normal(ki[7], (BATCH, CELLSIZE_W), jnp.float32)
    c_w = jax.random.normal(ki[8], (BATCH, CELLSIZE_W), jnp.float32)

    outs = pg_agent_forward(packed,
                            x_f, h_f, c_f, x_cr, h_cr, c_cr, x_w, h_w, c_w)
    outs = jax.block_until_ready(outs)

    # verify against pure-JAX f32 reference (same (h_f, h_f) aliasing for f net)
    # Tolerance relaxed because the kernel runs the two matmuls in bf16.
    ref_f = _ref_net(x_f, h_f, h_f, net_f)
    ref_cr = _ref_net(x_cr, h_cr, c_cr, net_cr)
    ref_w = _ref_net(x_w, h_w, c_w, net_w)
    ref = (*ref_f, *ref_cr, *ref_w)
    for got, want in zip(outs, ref):
        assert got.shape == want.shape and got.dtype == want.dtype
        assert jnp.allclose(got, want, atol=2e-2, rtol=2e-2), \
            float(jnp.max(jnp.abs(got - want)))

    print("KERNEL_OK")
</pallas_src>

<mosaic_0001>
module attributes {stable_mosaic.version = 11 : i64} {
  func.func @_pg_agent_kernel(%arg0: memref<2x192xbf16, #tpu.memory_space<vmem>>, %arg1: memref<2x128xf32, #tpu.memory_space<vmem>>, %arg2: memref<192x512xbf16, #tpu.memory_space<vmem>>, %arg3: memref<128x128xbf16, #tpu.memory_space<vmem>>, %arg4: memref<1x128xf32, #tpu.memory_space<vmem>>, %arg5: memref<2x384xf32, #tpu.memory_space<vmem>>) attributes {dimension_semantics = [], scalar_prefetch = 0 : i64, scratch_operands = 0 : i64, tpu.core_type = #tpu.core_type<tc>} {
    %c0 = arith.constant 0 : index
    %c0_0 = arith.constant 0 : index
    %0 = vector.load %arg0[%c0, %c0_0] : memref<2x192xbf16, #tpu.memory_space<vmem>>, vector<2x192xbf16>
    %c0_1 = arith.constant 0 : index
    %c0_2 = arith.constant 0 : index
    %1 = vector.load %arg2[%c0_1, %c0_2] : memref<192x512xbf16, #tpu.memory_space<vmem>>, vector<192x512xbf16>
    %cst = arith.constant dense<0.000000e+00> : vector<2x512xf32>
    %2 = tpu.matmul %0, %1, %cst {dimension_numbers = #tpu.dot_dimension_numbers<[1], [0], [0], [1], [0, 0, 1, 1], [], []>} : vector<2x192xbf16>, vector<192x512xbf16>, vector<2x512xf32> -> vector<2x512xf32>
    %3 = vector.extract_strided_slice %2 {offsets = [0, 0], sizes = [2, 128], strides = [1, 1]} : vector<2x512xf32> to vector<2x128xf32>
    %4 = arith.negf %3 : vector<2x128xf32>
    %5 = math.exp %4 : vector<2x128xf32>
    %cst_3 = arith.constant 1.000000e+00 : f32
    %6 = vector.broadcast %cst_3 : f32 to vector<2x128xf32>
    %7 = arith.addf %6, %5 : vector<2x128xf32>
    %8 = arith.divf %6, %7 : vector<2x128xf32>
    %9 = vector.extract_strided_slice %2 {offsets = [0, 128], sizes = [2, 128], strides = [1, 1]} : vector<2x512xf32> to vector<2x128xf32>
    %10 = arith.negf %9 : vector<2x128xf32>
    %11 = math.exp %10 : vector<2x128xf32>
    %cst_4 = arith.constant 1.000000e+00 : f32
    %12 = vector.broadcast %cst_4 : f32 to vector<2x128xf32>
    %13 = arith.addf %12, %11 : vector<2x128xf32>
    %14 = arith.divf %12, %13 : vector<2x128xf32>
    %15 = vector.extract_strided_slice %2 {offsets = [0, 256], sizes = [2, 128], strides = [1, 1]} : vector<2x512xf32> to vector<2x128xf32>
    %16 = math.tanh %15 : vector<2x128xf32>
    %17 = vector.extract_strided_slice %2 {offsets = [0, 384], sizes = [2, 128], strides = [1, 1]} : vector<2x512xf32> to vector<2x128xf32>
    %18 = arith.negf %17 : vector<2x128xf32>
    %19 = math.exp %18 : vector<2x128xf32>
    %cst_5 = arith.constant 1.000000e+00 : f32
    %20 = vector.broadcast %cst_5 : f32 to vector<2x128xf32>
    %21 = arith.addf %20, %19 : vector<2x128xf32>
    %22 = arith.divf %20, %21 : vector<2x128xf32>
    %c0_6 = arith.constant 0 : index
    %c0_7 = arith.constant 0 : index
    %23 = vector.load %arg1[%c0_6, %c0_7] : memref<2x128xf32, #tpu.memory_space<vmem>>, vector<2x128xf32>
    %24 = arith.mulf %14, %23 : vector<2x128xf32>
    %25 = arith.mulf %8, %16 : vector<2x128xf32>
    %26 = arith.addf %24, %25 : vector<2x128xf32>
    %27 = math.tanh %26 : vector<2x128xf32>
    %28 = arith.mulf %22, %27 : vector<2x128xf32>
    %29 = arith.truncf %28 : vector<2x128xf32> to vector<2x128xbf16>
    %c0_8 = arith.constant 0 : index
    %c0_9 = arith.constant 0 : index
    %30 = vector.load %arg3[%c0_8, %c0_9] : memref<128x128xbf16, #tpu.memory_space<vmem>>, vector<128x128xbf16>
    %cst_10 = arith.constant dense<0.000000e+00> : vector<2x128xf32>
    %31 = tpu.matmul %29, %30, %cst_10 {dimension_numbers = #tpu.dot_dimension_numbers<[1], [0], [0], [1], [0, 0, 1, 1], [], []>} : vector<2x128xbf16>, vector<128x128xbf16>, vector<2x128xf32> -> vector<2x128xf32>
    %c0_11 = arith.constant 0 : index
    %c0_12 = arith.constant 0 : index
    %32 = vector.load %arg4[%c0_11, %c0_12] : memref<1x128xf32, #tpu.memory_space<vmem>>, vector<1x128xf32>
    %33 = vector.broadcast %32 : vector<1x128xf32> to vector<2x128xf32>
    %34 = arith.addf %31, %33 : vector<2x128xf32>
    %35 = arith.negf %34 : vector<2x128xf32>
    %36 = math.exp %35 : vector<2x128xf32>
    %cst_13 = arith.constant 1.000000e+00 : f32
    %37 = vector.broadcast %cst_13 : f32 to vector<2x128xf32>
    %38 = arith.addf %37, %36 : vector<2x128xf32>
    %39 = arith.divf %37, %38 : vector<2x128xf32>
    %40 = tpu.concatenate %28, %26, %39 in 1 : vector<2x128xf32>, vector<2x128xf32>, vector<2x128xf32> -> vector<2x384xf32>
    %c0_14 = arith.constant 0 : index
    %c0_15 = arith.constant 0 : index
    %41 = vector.load %arg5[%c0_14, %c0_15] : memref<2x384xf32, #tpu.memory_space<vmem>>, vector<2x384xf32>
    tpu.vector_store %arg5[%c0_14, %c0_15], %40 {strides = array<i32>} : memref<2x384xf32, #tpu.memory_space<vmem>>, vector<2x384xf32>,
    return
  }
}

</mosaic_0001>

<llo_original>
// kernel: pg_agent_forward.1
$region0: #{pg_agent_forward.1}
  #allocation0 [shape = 'u32[]', space=smem, size = 0x4, offset = 0x4, fixed_abs, tag = 'smem constant byte address 0x4 - core index']
  #allocation1 [shape = 'u32[144,128]{1,0:T(1,128)}', space=vmem, size = 0x12000, scoped, tag = 'internal scratch']
  %s0 = inlined_call_operand.vmem [shape: bf16[2,192], index: 0, kind: input, shape index: {}]
  %s1 = inlined_call_operand.vmem [shape: f32[2,128], index: 1, kind: input, shape index: {}]
  %s2 = inlined_call_operand.hbm [shape: bf16[192,512], index: 2, kind: input, shape index: {}]
  %s3 = inlined_call_operand.hbm [shape: bf16[128,128], index: 3, kind: input, shape index: {}]
  %s4 = inlined_call_operand.vmem [shape: f32[1,128], index: 4, kind: input, shape index: {}]
  %s5 = inlined_call_operand.vmem [shape: f32[2,384], index: 5, kind: output, shape index: {}]
  %s6 = sld [smem:[#allocation0]]
  $region38: #{pg_agent_forward.1} parent=0
    _
  %s8 = ssub.s32 1, %s6
  %s9 = scalar_select 0, %s8, %s6
  $region1: #{pg_agent_forward.1} parent=0
    #allocation2 [shape = 'u8[196608]{0}', space=vmem, size = 0x30000, scoped, tag = 'input window, operand 2, single buffered']
    #allocation3 [shape = 's32[1]{0}', space=sflag, size = 0x4, scoped, tag = 'scoped memory for pg_agent_forward.1']
    #allocation4 [shape = 'u8[32768]{0}', space=vmem, size = 0x8000, scoped, tag = 'input window, operand 3, single buffered']
    #allocation5 [shape = 's32[1]{0}', space=sflag, size = 0x4, scoped, tag = 'scoped memory for pg_agent_forward.1']
    %10 = vsyncpa [#allocation3], 0
    %11 = vsyncpa [#allocation5], 0
    // Predicated region
    $region2: #{pg_agent_forward.1} parent=1 // pred_check
      _
    $region3: #{pg_agent_forward.1} parent=1 // pred_check_branch
      %13 = sbr.rel (0) target = $region5
    $region4: #{pg_agent_forward.1} parent=1 // pred_region
      _
    $region5: #{pg_agent_forward.1} parent=1 // pred_fallthru
      _
    // Predicated region
    $region6: #{pg_agent_forward.1} parent=1 // pred_check
      _
    $region7: #{pg_agent_forward.1} parent=1 // pred_check_branch
      %15 = sbr.rel (0) target = $region9
    $region8: #{pg_agent_forward.1} parent=1 // pred_region
      _
    $region9: #{pg_agent_forward.1} parent=1 // pred_fallthru
      _
    // Predicated region
    $region10: #{pg_agent_forward.1} parent=1 // pred_check
      _
    $region11: #{pg_agent_forward.1} parent=1 // pred_check_branch
      %17 = sbr.rel (0) target = $region13
    $region12: #{pg_agent_forward.1} parent=1 // pred_region
      %s19 = ssub.s32 6144, 6144
      %20 = vsyncadd [#allocation3], %s19
      %s21 = sshll.u32 [#allocation2], 4
      %s22 = int_to_ptr.vmem [resolvable:$true] %s21
      %27 = dma.hbm_to_vmem [thread:$0]  %s2, 6144, %s22, [#allocation3], 256, 256, 16
    $region13: #{pg_agent_forward.1} parent=1 // pred_fallthru
      _
    // Predicated region
    $region14: #{pg_agent_forward.1} parent=1 // pred_check
      _
    $region15: #{pg_agent_forward.1} parent=1 // pred_check_branch
      %29 = sbr.rel (0) target = $region17
    $region16: #{pg_agent_forward.1} parent=1 // pred_region
      %s31 = ssub.s32 1024, 1024
      %32 = vsyncadd [#allocation5], %s31
      %s33 = sshll.u32 [#allocation4], 4
      %s34 = int_to_ptr.vmem [resolvable:$true] %s33
      %39 = dma.hbm_to_vmem [thread:$0]  %s3, 1024, %s34, [#allocation5], 64, 64, 4
    $region17: #{pg_agent_forward.1} parent=1 // pred_fallthru
      _
    // Predicated region
    $region18: #{pg_agent_forward.1} parent=1 // pred_check
      _
    $region19: #{pg_agent_forward.1} parent=1 // pred_check_branch
      %41 = sbr.rel (0) target = $region21
    $region20: #{pg_agent_forward.1} parent=1 // pred_region
      _
    $region21: #{pg_agent_forward.1} parent=1 // pred_fallthru
      _
    // Predicated region
    $region22: #{pg_agent_forward.1} parent=1 // pred_check
      _
    $region23: #{pg_agent_forward.1} parent=1 // pred_check_branch
      %43 = sbr.rel (0) target = $region25
    $region24: #{pg_agent_forward.1} parent=1 // pred_region
      %44 = dma.done [#allocation3], 6144
    $region25: #{pg_agent_forward.1} parent=1 // pred_fallthru
      _
    // Predicated region
    $region26: #{pg_agent_forward.1} parent=1 // pred_check
      _
    $region27: #{pg_agent_forward.1} parent=1 // pred_check_branch
      %46 = sbr.rel (0) target = $region29
    $region28: #{pg_agent_forward.1} parent=1 // pred_region
      %47 = dma.done [#allocation5], 1024
    $region29: #{pg_agent_forward.1} parent=1 // pred_fallthru
      _
    %v49 = vld [vmem:[%s0] sm:$0x3]
    %v50 = vld [vmem:[#allocation2] sm:$0xff]
    %v51 = vld [vmem:[#allocation2 + $0x8] sm:$0xff]
    %v52 = vld [vmem:[#allocation2 + $0x10] sm:$0xff]
    %v53 = vld [vmem:[#allocation2 + $0x18] sm:$0xff]
    %v54 = vld [vmem:[#allocation2 + $0x20] sm:$0xff]
    %v55 = vld [vmem:[#allocation2 + $0x28] sm:$0xff]
    %v56 = vld [vmem:[#allocation2 + $0x30] sm:$0xff]
    %v57 = vld [vmem:[#allocation2 + $0x38] sm:$0xff]
    %v58 = vld [vmem:[#allocation2 + $0x40] sm:$0xff]
    %v59 = vld [vmem:[#allocation2 + $0x48] sm:$0xff]
    %v60 = vld [vmem:[#allocation2 + $0x50] sm:$0xff]
    %v61 = vld [vmem:[#allocation2 + $0x58] sm:$0xff]
    %v62 = vld [vmem:[#allocation2 + $0x60] sm:$0xff]
    %v63 = vld [vmem:[#allocation2 + $0x68] sm:$0xff]
    %v64 = vld [vmem:[#allocation2 + $0x70] sm:$0xff]
    %v65 = vld [vmem:[#allocation2 + $0x78] sm:$0xff]
    %v66 = vld [vmem:[#allocation2 + $0x80] sm:$0xff]
    %v67 = vld [vmem:[#allocation2 + $0x88] sm:$0xff]
    %v68 = vld [vmem:[#allocation2 + $0x90] sm:$0xff]
    %v69 = vld [vmem:[#allocation2 + $0x98] sm:$0xff]
    %v70 = vld [vmem:[#allocation2 + $0xa0] sm:$0xff]
    %v71 = vld [vmem:[#allocation2 + $0xa8] sm:$0xff]
    %v72 = vld [vmem:[#allocation2 + $0xb0] sm:$0xff]
    %v73 = vld [vmem:[#allocation2 + $0xb8] sm:$0xff]
    %v74 = vld [vmem:[#allocation2 + $0xc0] sm:$0xff]
    %v75 = vld [vmem:[#allocation2 + $0xc8] sm:$0xff]
    %v76 = vld [vmem:[#allocation2 + $0xd0] sm:$0xff]
    %v77 = vld [vmem:[#allocation2 + $0xd8] sm:$0xff]
    %v78 = vld [vmem:[#allocation2 + $0xe0] sm:$0xff]
    %v79 = vld [vmem:[#allocation2 + $0xe8] sm:$0xff]
    %v80 = vld [vmem:[#allocation2 + $0xf0] sm:$0xff]
    %v81 = vld [vmem:[#allocation2 + $0xf8] sm:$0xff]
    %v82 = vld [vmem:[#allocation2 + $0x100] sm:$0xff]
    %v83 = vld [vmem:[#allocation2 + $0x108] sm:$0xff]
    %v84 = vld [vmem:[#allocation2 + $0x110] sm:$0xff]
    %v85 = vld [vmem:[#allocation2 + $0x118] sm:$0xff]
    %v86 = vld [vmem:[#allocation2 + $0x120] sm:$0xff]
    %v87 = vld [vmem:[#allocation2 + $0x128] sm:$0xff]
    %v88 = vld [vmem:[#allocation2 + $0x130] sm:$0xff]
    %v89 = vld [vmem:[#allocation2 + $0x138] sm:$0xff]
    %v90 = vld [vmem:[#allocation2 + $0x140] sm:$0xff]
    %v91 = vld [vmem:[#allocation2 + $0x148] sm:$0xff]
    %v92 = vld [vmem:[#allocation2 + $0x150] sm:$0xff]
    %v93 = vld [vmem:[#allocation2 + $0x158] sm:$0xff]
    %v94 = vld [vmem:[#allocation2 + $0x160] sm:$0xff]
    %v95 = vld [vmem:[#allocation2 + $0x168] sm:$0xff]
    %v96 = vld [vmem:[#allocation2 + $0x170] sm:$0xff]
    %v97 = vld [vmem:[#allocation2 + $0x178] sm:$0xff]
    %v100 = vunpack.c.l.s4 1966171168
    %v101 = vunpack.c.0.s8 %v100
    %v102 = vlaneseq
    %v103 = vshrl.u32 %v102, 7
    %v104 = vsub.s32 %v101, %v103
    %v105 = vrot.slane %v49, %v104
    %v106 = vcombine.high %v105, %v105
    %v108 = vunpack.c.l.s4 1966171168
    %v109 = vunpack.c.0.s8 %v108
    %v110 = vlaneseq
    %v111 = vshrl.u32 %v110, 7
    %v112 = vsub.s32 %v109, %v111
    %v113 = vrot.slane %v105, %v112
    %v115 = vunpack.c.l.s4 1966171168
    %v116 = vunpack.c.0.s8 %v115
    %v117 = vlaneseq
    %v118 = vshrl.u32 %v117, 7
    %v119 = vsub.s32 %v116, %v118
    %v120 = vrot.slane %v106, %v119
    %v170 = vunpack.c.l.b16 %v50
    %v171 = vunpack.c.h.b16 %v50
    %v172 = vunpack.c.l.b16 %v51
    %v173 = vunpack.c.h.b16 %v51
    %v174 = vunpack.c.l.b16 %v52
    %v175 = vunpack.c.h.b16 %v52
    %v176 = vunpack.c.l.b16 %v53
    %v177 = vunpack.c.h.b16 %v53
    %v178 = vunpack.c.l.b16 %v54
    %v179 = vunpack.c.h.b16 %v54
    %v180 = vunpack.c.l.b16 %v55
    %v181 = vunpack.c.h.b16 %v55
    %v182 = vunpack.c.l.b16 %v56
    %v183 = vunpack.c.h.b16 %v56
    %v184 = vunpack.c.l.b16 %v57
    %v185 = vunpack.c.h.b16 %v57
    %v186 = vunpack.c.l.b16 %v58
    %v187 = vunpack.c.h.b16 %v58
    %v188 = vunpack.c.l.b16 %v59
    %v189 = vunpack.c.h.b16 %v59
    %v190 = vunpack.c.l.b16 %v60
    %v191 = vunpack.c.h.b16 %v60
    %v192 = vunpack.c.l.b16 %v61
    %v193 = vunpack.c.h.b16 %v61
    %v194 = vunpack.c.l.b16 %v62
    %v195 = vunpack.c.h.b16 %v62
    %v196 = vunpack.c.l.b16 %v63
    %v197 = vunpack.c.h.b16 %v63
    %v198 = vunpack.c.l.b16 %v64
    %v199 = vunpack.c.h.b16 %v64
    %v200 = vunpack.c.l.b16 %v65
    %v201 = vunpack.c.h.b16 %v65
    %v202 = vunpack.c.l.b16 %v66
    %v203 = vunpack.c.h.b16 %v66
    %v204 = vunpack.c.l.b16 %v67
    %v205 = vunpack.c.h.b16 %v67
    %v206 = vunpack.c.l.b16 %v68
    %v207 = vunpack.c.h.b16 %v68
    %v208 = vunpack.c.l.b16 %v69
    %v209 = vunpack.c.h.b16 %v69
    %v210 = vunpack.c.l.b16 %v70
    %v211 = vunpack.c.h.b16 %v70
    %v212 = vunpack.c.l.b16 %v71
    %v213 = vunpack.c.h.b16 %v71
    %v214 = vunpack.c.l.b16 %v72
    %v215 = vunpack.c.h.b16 %v72
    %v216 = vunpack.c.l.b16 %v73
    %v217 = vunpack.c.h.b16 %v73
    %v218 = vunpack.c.l.b16 %v74
    %v219 = vunpack.c.h.b16 %v74
    %v220 = vunpack.c.l.b16 %v75
    %v221 = vunpack.c.h.b16 %v75
    %v222 = vunpack.c.l.b16 %v76
    %v223 = vunpack.c.h.b16 %v76
    %v224 = vunpack.c.l.b16 %v77
    %v225 = vunpack.c.h.b16 %v77
    %v226 = vunpack.c.l.b16 %v78
    %v227 = vunpack.c.h.b16 %v78
    %v228 = vunpack.c.l.b16 %v79
    %v229 = vunpack.c.h.b16 %v79
    %v230 = vunpack.c.l.b16 %v80
    %v231 = vunpack.c.h.b16 %v80
    %v232 = vunpack.c.l.b16 %v81
    %v233 = vunpack.c.h.b16 %v81
    %v234 = vunpack.c.l.b16 %v82
    %v235 = vunpack.c.h.b16 %v82
    %v236 = vunpack.c.l.b16 %v83
    %v237 = vunpack.c.h.b16 %v83
    %v238 = vunpack.c.l.b16 %v84
    %v239 = vunpack.c.h.b16 %v84
    %v240 = vunpack.c.l.b16 %v85
    %v241 = vunpack.c.h.b16 %v85
    %v242 = vunpack.c.l.b16 %v86
    %v243 = vunpack.c.h.b16 %v86
    %v244 = vunpack.c.l.b16 %v87
    %v245 = vunpack.c.h.b16 %v87
    %v246 = vunpack.c.l.b16 %v88
    %v247 = vunpack.c.h.b16 %v88
    %v248 = vunpack.c.l.b16 %v89
    %v249 = vunpack.c.h.b16 %v89
    %v250 = vunpack.c.l.b16 %v90
    %v251 = vunpack.c.h.b16 %v90
    %v252 = vunpack.c.l.b16 %v91
    %v253 = vunpack.c.h.b16 %v91
    %v254 = vunpack.c.l.b16 %v92
    %v255 = vunpack.c.h.b16 %v92
    %v256 = vunpack.c.l.b16 %v93
    %v257 = vunpack.c.h.b16 %v93
    %v258 = vunpack.c.l.b16 %v94
    %v259 = vunpack.c.h.b16 %v94
    %v260 = vunpack.c.l.b16 %v95
    %v261 = vunpack.c.h.b16 %v95
    %v262 = vunpack.c.l.b16 %v96
    %v263 = vunpack.c.h.b16 %v96
    %v264 = vunpack.c.l.b16 %v97
    %v265 = vunpack.c.h.b16 %v97
    %v266 = vpack.c.b16 %v174, %v170
    %v267 = vpack.c.b16 %v175, %v171
    %v268 = vpack.c.b16 %v176, %v172
    %v269 = vpack.c.b16 %v177, %v173
    %v270 = vpack.c.b16 %v182, %v178
    %v271 = vpack.c.b16 %v183, %v179
    %v272 = vpack.c.b16 %v184, %v180
    %v273 = vpack.c.b16 %v185, %v181
    %v274 = vpack.c.b16 %v190, %v186
    %v275 = vpack.c.b16 %v191, %v187
    %v276 = vpack.c.b16 %v192, %v188
    %v277 = vpack.c.b16 %v193, %v189
    %v278 = vpack.c.b16 %v198, %v194
    %v279 = vpack.c.b16 %v199, %v195
    %v280 = vpack.c.b16 %v200, %v196
    %v281 = vpack.c.b16 %v201, %v197
    %v282 = vpack.c.b16 %v206, %v202
    %v283 = vpack.c.b16 %v207, %v203
    %v284 = vpack.c.b16 %v208, %v204
    %v285 = vpack.c.b16 %v209, %v205
    %v286 = vpack.c.b16 %v214, %v210
    %v287 = vpack.c.b16 %v215, %v211
    %v288 = vpack.c.b16 %v216, %v212
    %v289 = vpack.c.b16 %v217, %v213
    %v290 = vpack.c.b16 %v222, %v218
    %v291 = vpack.c.b16 %v223, %v219
    %v292 = vpack.c.b16 %v224, %v220
    %v293 = vpack.c.b16 %v225, %v221
    %v294 = vpack.c.b16 %v230, %v226
    %v295 = vpack.c.b16 %v231, %v227
    %v296 = vpack.c.b16 %v232, %v228
    %v297 = vpack.c.b16 %v233, %v229
    %v298 = vpack.c.b16 %v238, %v234
    %v299 = vpack.c.b16 %v239, %v235
    %v300 = vpack.c.b16 %v240, %v236
    %v301 = vpack.c.b16 %v241, %v237
    %v302 = vpack.c.b16 %v246, %v242
    %v303 = vpack.c.b16 %v247, %v243
    %v304 = vpack.c.b16 %v248, %v244
    %v305 = vpack.c.b16 %v249, %v245
    %v306 = vpack.c.b16 %v254, %v250
    %v307 = vpack.c.b16 %v255, %v251
    %v308 = vpack.c.b16 %v256, %v252
    %v309 = vpack.c.b16 %v257, %v253
    %v310 = vpack.c.b16 %v262, %v258
    %v311 = vpack.c.b16 %v263, %v259
    %v312 = vpack.c.b16 %v264, %v260
    %v313 = vpack.c.b16 %v265, %v261
    %vm362 = vcmask 523264
    %v364 = vsel %vm362, %v120, 0
    %366 = vmatprep.subr.bf16.mxu0 %v295
    %367 = vmatpush1.bf16.msra.mxu0 %v294
    %368 = vmatprep.subr.bf16.mxu0 %v291
    %369 = vmatpush1.bf16.msra.mxu0 %v290
    %370 = vmatprep.subr.bf16.mxu0 %v287
    %371 = vmatpush1.bf16.msra.mxu0 %v286
    %372 = vmatprep.subr.bf16.mxu0 %v283
    %373 = vmatpush1.bf16.msra.mxu0 %v282
    %374 = vmatprep.subr.bf16.mxu0 %v279
    %375 = vmatpush1.bf16.msra.mxu0 %v278
    %376 = vmatprep.subr.bf16.mxu0 %v275
    %377 = vmatpush1.bf16.msra.mxu0 %v274
    %378 = vmatprep.subr.bf16.mxu0 %v271
    %379 = vmatpush1.bf16.msra.mxu0 %v270
    %380 = vmatprep.subr.bf16.mxu0 %v267
    %381 = vmatpush1.bf16.msra.mxu0 %v266
    %382 = vmatprep.subr.bf16.mxu0 0
    %383 = vmatpush2.bf16.msra.mxu0 0
    %384 = vmatprep.subr.bf16.mxu0 0
    %385 = vmatpush2.bf16.msra.mxu0 0
    %386 = vmatprep.subr.bf16.mxu0 0
    %387 = vmatpush2.bf16.msra.mxu0 0
    %388 = vmatprep.subr.bf16.mxu0 0
    %389 = vmatpush2.bf16.msra.mxu0 0
    %390 = vmatprep.subr.bf16.mxu0 %v311
    %391 = vmatpush2.bf16.msra.mxu0 %v310
    %392 = vmatprep.subr.bf16.mxu0 %v307
    %393 = vmatpush2.bf16.msra.mxu0 %v306
    %394 = vmatprep.subr.bf16.mxu0 %v303
    %395 = vmatpush2.bf16.msra.mxu0 %v302
    %396 = vmatprep.subr.bf16.mxu0 %v299
    %397 = vmatpush2.bf16.msra.mxu0 %v298
    %398 = vmatprep.mubr.bf16.mxu0 %v364
    %399 = vmatmul.mubr.bf16.gmra.mxu0 %v113
    %v400 = vpop.f32.mrf.mxu0
    %v401 = vadd.f32 0.0, %v400
    %v402 = vpop.f32.mrf.mxu0
    %v403 = vadd.f32 0.0, %v402
    %v404 = vpop.f32.mrf.mxu0
    %v405 = vpop.f32.mrf.mxu0
    %406 = vdwg.mxu0
    %407 = vmatprep.subr.bf16.mxu0 %v297
    %408 = vmatpush1.bf16.msra.mxu0 %v296
    %409 = vmatprep.subr.bf16.mxu0 %v293
    %410 = vmatpush1.bf16.msra.mxu0 %v292
    %411 = vmatprep.subr.bf16.mxu0 %v289
    %412 = vmatpush1.bf16.msra.mxu0 %v288
    %413 = vmatprep.subr.bf16.mxu0 %v285
    %414 = vmatpush1.bf16.msra.mxu0 %v284
    %415 = vmatprep.subr.bf16.mxu0 %v281
    %416 = vmatpush1.bf16.msra.mxu0 %v280
    %417 = vmatprep.subr.bf16.mxu0 %v277
    %418 = vmatpush1.bf16.msra.mxu0 %v276
    %419 = vmatprep.subr.bf16.mxu0 %v273
    %420 = vmatpush1.bf16.msra.mxu0 %v272
    %421 = vmatprep.subr.bf16.mxu0 %v269
    %422 = vmatpush1.bf16.msra.mxu0 %v268
    %423 = vmatprep.subr.bf16.mxu0 0
    %424 = vmatpush2.bf16.msra.mxu0 0
    %425 = vmatprep.subr.bf16.mxu0 0
    %426 = vmatpush2.bf16.msra.mxu0 0
    %427 = vmatprep.subr.bf16.mxu0 0
    %428 = vmatpush2.bf16.msra.mxu0 0
    %429 = vmatprep.subr.bf16.mxu0 0
    %430 = vmatpush2.bf16.msra.mxu0 0
    %431 = vmatprep.subr.bf16.mxu0 %v313
    %432 = vmatpush2.bf16.msra.mxu0 %v312
    %433 = vmatprep.subr.bf16.mxu0 %v309
    %434 = vmatpush2.bf16.msra.mxu0 %v308
    %435 = vmatprep.subr.bf16.mxu0 %v305
    %436 = vmatpush2.bf16.msra.mxu0 %v304
    %437 = vmatprep.subr.bf16.mxu0 %v301
    %438 = vmatpush2.bf16.msra.mxu0 %v300
    %439 = vmatprep.mubr.bf16.mxu0 %v364
    %440 = vmatmul.mubr.bf16.gmra.mxu0 %v113
    %v441 = vpop.f32.mrf.mxu0
    %v442 = vadd.f32 0.0, %v441
    %v443 = vpop.f32.mrf.mxu0
    %v444 = vadd.f32 0.0, %v443
    %v445 = vpop.f32.mrf.mxu0
    %v446 = vpop.f32.mrf.mxu0
    %447 = vdwg.mxu0
    %v448 = vxor.u32 %v401, 2147483648
    %v449 = vmul.f32 %v448, 1.442695
    %v450 = vpow.pop %v449
    %v451 = vadd.f32 %v450, 1.0
    %v452 = vrcp.pop %v451
    %v453 = vmul.f32 1.0, %v452
    %v454 = vxor.u32 %v403, 2147483648
    %v455 = vmul.f32 %v454, 1.442695
    %v456 = vpow.pop %v455
    %v457 = vadd.f32 %v456, 1.0
    %v458 = vrcp.pop %v457
    %v459 = vmul.f32 1.0, %v458
    %v460 = vtanh.pop %v442
    %v461 = vxor.u32 %v444, 2147483648
    %v462 = vmul.f32 %v461, 1.442695
    %v463 = vpow.pop %v462
    %v464 = vadd.f32 %v463, 1.0
    %v465 = vrcp.pop %v464
    %v466 = vmul.f32 1.0, %v465
    %v467 = vld [vmem:[%s1] sm:$0x3]
    %v468 = vmul.f32 %v459, %v467
    %v469 = vmul.f32 %v453, %v460
    %v470 = vadd.f32 %v468, %v469
    %v471 = vtanh.pop %v470
    %v472 = vmul.f32 %v466, %v471
    %v473 = vpack.c.bf16 %v472, %v472
    %v474 = vld [vmem:[#allocation4] sm:$0xf]
    %v475 = vld [vmem:[#allocation4 + $0x4] sm:$0xf]
    %v476 = vld [vmem:[#allocation4 + $0x8] sm:$0xf]
    %v477 = vld [vmem:[#allocation4 + $0xc] sm:$0xf]
    %v478 = vld [vmem:[#allocation4 + $0x10] sm:$0xf]
    %v479 = vld [vmem:[#allocation4 + $0x14] sm:$0xf]
    %v480 = vld [vmem:[#allocation4 + $0x18] sm:$0xf]
    %v481 = vld [vmem:[#allocation4 + $0x1c] sm:$0xf]
    %v482 = vld [vmem:[#allocation4 + $0x20] sm:$0xf]
    %v483 = vld [vmem:[#allocation4 + $0x24] sm:$0xf]
    %v484 = vld [vmem:[#allocation4 + $0x28] sm:$0xf]
    %v485 = vld [vmem:[#allocation4 + $0x2c] sm:$0xf]
    %v486 = vld [vmem:[#allocation4 + $0x30] sm:$0xf]
    %v487 = vld [vmem:[#allocation4 + $0x34] sm:$0xf]
    %v488 = vld [vmem:[#allocation4 + $0x38] sm:$0xf]
    %v489 = vld [vmem:[#allocation4 + $0x3c] sm:$0xf]
    %v490 = vld [vmem:[%s4] sm:$0x1]
    %v492 = vlaneseq
    %v493 = vshrl.u32 %v492, 7
    %v494 = vsub.s32 0, %v493
    %v495 = vrot.slane %v490, %v494
    %v513 = vunpack.c.l.b16 %v474
    %v514 = vunpack.c.l.b16 %v475
    %v515 = vunpack.c.l.b16 %v476
    %v516 = vunpack.c.l.b16 %v477
    %v517 = vunpack.c.l.b16 %v478
    %v518 = vunpack.c.l.b16 %v479
    %v519 = vunpack.c.l.b16 %v480
    %v520 = vunpack.c.l.b16 %v481
    %v521 = vunpack.c.l.b16 %v482
    %v522 = vunpack.c.l.b16 %v483
    %v523 = vunpack.c.l.b16 %v484
    %v524 = vunpack.c.l.b16 %v485
    %v525 = vunpack.c.l.b16 %v486
    %v526 = vunpack.c.l.b16 %v487
    %v527 = vunpack.c.l.b16 %v488
    %v528 = vunpack.c.l.b16 %v489
    %v529 = vpack.c.b16 %v514, %v513
    %v530 = vpack.c.b16 %v516, %v515
    %v531 = vpack.c.b16 %v518, %v517
    %v532 = vpack.c.b16 %v520, %v519
    %v533 = vpack.c.b16 %v522, %v521
    %v534 = vpack.c.b16 %v524, %v523
    %v535 = vpack.c.b16 %v526, %v525
    %v536 = vpack.c.b16 %v528, %v527
    %545 = vmatprep.subr.bf16.mxu0 0
    %546 = vmatpush1.bf16.msra.mxu0 %v536
    %547 = vmatprep.subr.bf16.mxu0 0
    %548 = vmatpush1.bf16.msra.mxu0 %v535
    %549 = vmatprep.subr.bf16.mxu0 0
    %550 = vmatpush1.bf16.msra.mxu0 %v534
    %551 = vmatprep.subr.bf16.mxu0 0
    %552 = vmatpush1.bf16.msra.mxu0 %v533
    %553 = vmatprep.subr.bf16.mxu0 0
    %554 = vmatpush1.bf16.msra.mxu0 %v532
    %555 = vmatprep.subr.bf16.mxu0 0
    %556 = vmatpush1.bf16.msra.mxu0 %v531
    %557 = vmatprep.subr.bf16.mxu0 0
    %558 = vmatpush1.bf16.msra.mxu0 %v530
    %559 = vmatprep.subr.bf16.mxu0 0
    %560 = vmatpush1.bf16.msra.mxu0 %v529
    %561 = vmatprep.subr.bf16.mxu0 0
    %562 = vmatpush2.bf16.msra.mxu0 0
    %563 = vmatprep.subr.bf16.mxu0 0
    %564 = vmatpush2.bf16.msra.mxu0 0
    %565 = vmatprep.subr.bf16.mxu0 0
    %566 = vmatpush2.bf16.msra.mxu0 0
    %567 = vmatprep.subr.bf16.mxu0 0
    %568 = vmatpush2.bf16.msra.mxu0 0
    %569 = vmatprep.subr.bf16.mxu0 0
    %570 = vmatpush2.bf16.msra.mxu0 0
    %571 = vmatprep.subr.bf16.mxu0 0
    %572 = vmatpush2.bf16.msra.mxu0 0
    %573 = vmatprep.subr.bf16.mxu0 0
    %574 = vmatpush2.bf16.msra.mxu0 0
    %575 = vmatprep.subr.bf16.mxu0 0
    %576 = vmatpush2.bf16.msra.mxu0 0
    %577 = vmatprep.mubr.bf16.mxu0 0
    %578 = vmatmul.mubr.bf16.gmra.mxu0 %v473
    %v579 = vpop.f32.mrf.mxu0
    %v580 = vadd.f32 %v495, %v579
    %v581 = vpop.f32.mrf.mxu0
    %v582 = vpop.f32.mrf.mxu0
    %v583 = vpop.f32.mrf.mxu0
    %584 = vdwg.mxu0
    %v585 = vxor.u32 %v580, 2147483648
    %v586 = vmul.f32 %v585, 1.442695
    %v587 = vpow.pop %v586
    %v588 = vadd.f32 %v587, 1.0
    %v589 = vrcp.pop %v588
    %v590 = vmul.f32 1.0, %v589
    %v594 = vcombine.low %v472, %v470
    %v596 = vunpack.c.l.s4 1983009808
    %v597 = vunpack.c.0.s8 %v596
    %v598 = vlaneseq
    %v599 = vshrl.u32 %v598, 7
    %v600 = vsub.s32 %v597, %v599
    %v601 = vrot.slane %v594, %v600
    %v603 = vunpack.c.l.s4 1983009808
    %v604 = vunpack.c.0.s8 %v603
    %v605 = vlaneseq
    %v606 = vshrl.u32 %v605, 7
    %v607 = vsub.s32 %v604, %v606
    %v608 = vrot.slane %v590, %v607
    %v609 = vcombine.low %v601, %v608
    %611 = vst [vmem:[%s5] sm:$0x3f] %v609
    // Predicated region
    $region30: #{pg_agent_forward.1} parent=1 // pred_check
      _
    $region31: #{pg_agent_forward.1} parent=1 // pred_check_branch
      %613 = sbr.rel (0) target = $region33
    $region32: #{pg_agent_forward.1} parent=1 // pred_region
      _
    $region33: #{pg_agent_forward.1} parent=1 // pred_fallthru
      _
    // Predicated region
    $region34: #{pg_agent_forward.1} parent=1 // pred_check
      _
    $region35: #{pg_agent_forward.1} parent=1 // pred_check_branch
      %615 = sbr.rel (0) target = $region37
    $region36: #{pg_agent_forward.1} parent=1 // pred_region
      _
    $region37: #{pg_agent_forward.1} parent=1 // pred_fallthru
      _
    %616 = vsyncpa [#allocation3], 1
    %617 = vsyncpa [#allocation5], 1

</llo_original>
